<compile_context>
chip_gen: v5e
topology: v5e:2x2
jax: 0.10.0
libtpu: 0.0.40
codegen_flags: <defaults>
</compile_context>

<pallas_src>
import functools
import math

import jax
import jax.numpy as jnp
from jax import lax
from jax.experimental import pallas as pl
from jax.experimental.pallas import tpu as pltpu

EPS = 1e-5


def _round_up(a, b):
    return -(-a // b) * b


def _vmem_capacity_bytes():
    """Physical VMEM of the current TPU generation (fallback 64 MiB == the
    smallest among v5e/v6e/v7x, so sizing is always safe)."""
    try:
        cap = int(getattr(pltpu.get_tpu_info(), "vmem_capacity_bytes"))
        if cap > 0:
            return cap
    except Exception:
        pass
    return 64 << 20


def _choose_lane_tile(f_lane):
    """Multiple-of-128 lane tile dividing f_lane.  Never falls back to an
    unbounded full-extent block: above 2048 lanes we pick a divisor tile
    (worst case 128) and rely on row tiling for pipelining."""
    if f_lane <= 2048:
        return f_lane
    for tf in (2048, 1024, 512, 256, 128):
        if f_lane % tf == 0:
            return tf
    return 128   # unreachable: f_lane is always a multiple of 128


def _choose_row_tile(n_rows, tf, itemsize, budget):
    """Largest multiple-of-8 row tile whose per-step working set
    (2x double-buffered input + 2x double-buffered output + f32 temporaries)
    stays within `budget`."""
    bytes_per_row = tf * (4 * itemsize + 8)
    tr = max(8, (budget // bytes_per_row) // 8 * 8)
    tr = min(tr, 8192)                            # keep per-step granularity sane
    tr = min(tr, _round_up(max(n_rows, 1), 8))    # never exceed (padded) rows
    return tr


def _stats_kernel(x_ref, gamma_ref, beta_ref, scale_ref, shift_ref,
                  sum_sc, sq_sc, *, fold, feat, inv_n):
    r = pl.program_id(1)

    @pl.when(r == 0)
    def _():
        sum_sc[...] = jnp.zeros_like(sum_sc)
        sq_sc[...] = jnp.zeros_like(sq_sc)

    # Fused statistics: one traversal of the row tile for sum and sum(x^2),
    # upcast on the fly (no full-block f32 copy held across passes).
    xf = x_ref[...].astype(jnp.float32)                    # (tr, tf)
    sum_sc[...] += jnp.sum(xf, axis=0, keepdims=True)      # (1, tf)
    sq_sc[...] += jnp.sum(xf * xf, axis=0, keepdims=True)  # (1, tf)

    @pl.when(r == pl.num_programs(1) - 1)
    def _():
        s = sum_sc[...]
        sq = sq_sc[...]
        if fold > 1:
            # Rows were folded into `fold` lane groups of width `feat`
            # (fold = 128/gcd(feat,128) is a power of two).  A log2(fold)
            # roll-doubling tree leaves EVERY lane holding the total over all
            # groups for its feature — XLU slot, no lane slicing needed.
            shift_amt = feat
            while shift_amt < fold * feat:
                s = s + pltpu.roll(s, shift=shift_amt, axis=1)
                sq = sq + pltpu.roll(sq, shift=shift_amt, axis=1)
                shift_amt *= 2
        mean = s * inv_n
        # E[x^2] - mean^2 can go slightly negative from f32 cancellation;
        # clamp so rsqrt never sees a negative argument.
        var = jnp.maximum(sq * inv_n - mean * mean, 0.0)
        inv_std = lax.rsqrt(var + EPS)                      # EUP slot
        gamma = gamma_ref[...].astype(jnp.float32)
        beta = beta_ref[...].astype(jnp.float32)
        scale = gamma * inv_std
        scale_ref[...] = scale
        shift_ref[...] = beta - mean * scale


def _normalize_kernel(x_ref, scale_ref, shift_ref, o_ref):
    xf = x_ref[...].astype(jnp.float32)
    o_ref[...] = (xf * scale_ref[...] + shift_ref[...]).astype(o_ref.dtype)


def batch_norm_point(x, gamma, beta):
    """x: (s1, s2, feat_size); gamma, beta: (feat_size,)."""
    assert x.ndim == 3
    s1, s2, f = x.shape
    assert gamma.shape == (f,) and beta.shape == (f,)
    n = s1 * s2
    in_dt = x.dtype

    # ---- lane-dense (multiple-of-128) feature layout -------------------------
    if f < 128:
        fold = 128 // math.gcd(f, 128)     # power of two; f*fold % 128 == 0
        f_pad = f
    else:
        fold = 1
        f_pad = _round_up(f, 128)          # zero-pad features up to 128-multiple
    f_lane = f_pad * fold

    # fold path needs all `fold` groups of a feature in one lane block
    tf = f_lane if fold > 1 else _choose_lane_tile(f_lane)

    # ---- generation-aware VMEM sizing ----------------------------------------
    vmem_cap = _vmem_capacity_bytes()      # 128 MiB v5e/v6e, 64 MiB v7x
    budget = (vmem_cap * 5) // 8           # per-step working-set budget
    vmem_limit = (vmem_cap * 3) // 4       # scoped-VMEM limit we request

    n_rows_raw = -(-n // fold)             # rows after lane folding
    tr = _choose_row_tile(n_rows_raw, tf, in_dt.itemsize, budget)

    # ---- zero-pad rows / features so blocks tile exactly ----------------------
    # Zero rows contribute nothing to sum / sumsq (inv_n uses the TRUE N);
    # padded feature columns are sliced off the output.
    n_rows_p = _round_up(n_rows_raw, tr)
    n_p = n_rows_p * fold

    x2d = x.reshape(n, f)
    if n_p > n or f_pad > f:
        x2d = jnp.pad(x2d, ((0, n_p - n), (0, f_pad - f)))
    x2d = x2d.reshape(n_rows_p, f_lane)

    gamma_p = gamma if f_pad == f else jnp.pad(gamma, (0, f_pad - f))
    beta_p = beta if f_pad == f else jnp.pad(beta, (0, f_pad - f))
    gamma_l = jnp.tile(gamma_p, fold).reshape(1, f_lane)
    beta_l = jnp.tile(beta_p, fold).reshape(1, f_lane)

    f_tiles = f_lane // tf
    r_tiles = n_rows_p // tr

    cparams_stats = pltpu.CompilerParams(
        dimension_semantics=("parallel", "arbitrary"),
        vmem_limit_bytes=int(vmem_limit))
    cparams_norm = pltpu.CompilerParams(
        dimension_semantics=("parallel", "parallel"),
        vmem_limit_bytes=int(vmem_limit))

    # ---- pass 1: per-feature scale / shift ------------------------------------
    stats_kernel = functools.partial(
        _stats_kernel, fold=fold, feat=f_pad, inv_n=1.0 / n)
    scale, shift = pl.pallas_call(
        stats_kernel,
        out_shape=(jax.ShapeDtypeStruct((1, f_lane), jnp.float32),
                   jax.ShapeDtypeStruct((1, f_lane), jnp.float32)),
        grid_spec=pltpu.PrefetchScalarGridSpec(
            num_scalar_prefetch=0,
            grid=(f_tiles, r_tiles),
            in_specs=[
                pl.BlockSpec((tr, tf), lambda i, r: (r, i)),
                pl.BlockSpec((1, tf), lambda i, r: (0, i)),
                pl.BlockSpec((1, tf), lambda i, r: (0, i)),
            ],
            out_specs=[
                pl.BlockSpec((1, tf), lambda i, r: (0, i)),
                pl.BlockSpec((1, tf), lambda i, r: (0, i)),
            ],
            scratch_shapes=[pltpu.VMEM((1, tf), jnp.float32),
                            pltpu.VMEM((1, tf), jnp.float32)]),
        compiler_params=cparams_stats,
    )(x2d, gamma_l, beta_l)

    # ---- pass 2: y = x * scale + shift ----------------------------------------
    out2d = pl.pallas_call(
        _normalize_kernel,
        out_shape=jax.ShapeDtypeStruct((n_rows_p, f_lane), in_dt),
        grid_spec=pltpu.PrefetchScalarGridSpec(
            num_scalar_prefetch=0,
            grid=(f_tiles, r_tiles),
            in_specs=[
                pl.BlockSpec((tr, tf), lambda i, r: (r, i)),
                pl.BlockSpec((1, tf), lambda i, r: (0, i)),
                pl.BlockSpec((1, tf), lambda i, r: (0, i)),
            ],
            out_specs=pl.BlockSpec((tr, tf), lambda i, r: (r, i))),
        compiler_params=cparams_norm,
    )(x2d, scale, shift)

    out = out2d.reshape(n_p, f_pad)[:n, :f]
    return out.reshape(s1, s2, f)


def _reference(x, gamma, beta):
    s1, s2, f = x.shape
    x2d = x.reshape(s1 * s2, f).astype(jnp.float32)
    mean = jnp.mean(x2d, axis=0, keepdims=True)
    var = jnp.mean((x2d - mean) ** 2, axis=0, keepdims=True)
    y = (x2d - mean) / jnp.sqrt(var + EPS) * gamma[None, :] + beta[None, :]
    return y.reshape(s1, s2, f).astype(x.dtype)


if __name__ == "__main__":
    key = jax.random.PRNGKey(0)
    k1, k2, k3 = jax.random.split(key, 3)

    # Case 1: F < 128 -> lane-fold path (fold=4, f_lane=128).
    s1, s2, feat = 2, 8, 32
    x = jax.random.normal(k1, (s1, s2, feat), dtype=jnp.float32)
    gamma = 1.0 + 0.1 * jnp.arange(feat, dtype=jnp.float32)
    beta = 0.01 * jnp.arange(feat, dtype=jnp.float32)
    out = batch_norm_point(x, gamma, beta)
    jax.block_until_ready(out)
    ref = _reference(x, gamma, beta)
    assert out.shape == (s1, s2, feat)
    assert jnp.allclose(out, ref, atol=1e-4, rtol=1e-4)

    # Case 2: wide F, multiple of 128 (lane-tiled path, tf=2048).
    s1b, s2b, featb = 2, 8, 2048
    xb = jax.random.normal(k2, (s1b, s2b, featb), dtype=jnp.float32)
    gammab = 1.0 + 1e-3 * jnp.arange(featb, dtype=jnp.float32)
    betab = 1e-3 * jnp.arange(featb, dtype=jnp.float32)
    outb = batch_norm_point(xb, gammab, betab)
    jax.block_until_ready(outb)
    refb = _reference(xb, gammab, betab)
    assert outb.shape == (s1b, s2b, featb)
    assert jnp.allclose(outb, refb, atol=1e-4, rtol=1e-4)

    # Case 3: awkward F (100 -> fold=32, f_lane=3200) with zero-row padding
    # (n=21 is not a multiple of fold) -- exercises the padded lane-dense path.
    s1c, s2c, featc = 3, 7, 100
    xc = jax.random.normal(k3, (s1c, s2c, featc), dtype=jnp.float32)
    gammac = 1.0 + 0.02 * jnp.arange(featc, dtype=jnp.float32)
    betac = 0.03 * jnp.arange(featc, dtype=jnp.float32)
    outc = batch_norm_point(xc, gammac, betac)
    jax.block_until_ready(outc)
    refc = _reference(xc, gammac, betac)
    assert outc.shape == (s1c, s2c, featc)
    assert jnp.allclose(outc, refc, atol=1e-4, rtol=1e-4)

    print("KERNEL_OK")
</pallas_src>

<mosaic_0001>
module attributes {stable_mosaic.version = 11 : i64} {
  func.func @_stats_kernel(%arg0: i32, %arg1: i32, %arg2: memref<8x128xf32, #tpu.memory_space<vmem>>, %arg3: memref<1x128xf32, #tpu.memory_space<vmem>>, %arg4: memref<1x128xf32, #tpu.memory_space<vmem>>, %arg5: memref<1x128xf32, #tpu.memory_space<vmem>>, %arg6: memref<1x128xf32, #tpu.memory_space<vmem>>, %arg7: memref<1x128xf32, #tpu.memory_space<vmem>>, %arg8: memref<1x128xf32, #tpu.memory_space<vmem>>) attributes {dimension_semantics = [#tpu.dimension_semantics<parallel>, #tpu.dimension_semantics<arbitrary>], iteration_bounds = array<i64: 1, 1>, scalar_prefetch = 0 : i64, scratch_operands = 2 : i64, tpu.core_type = #tpu.core_type<tc>, window_params = [{transform_indices = @transform_0, window_bounds = array<i64: 8, 128>}, {transform_indices = @transform_1, window_bounds = array<i64: 1, 128>}, {transform_indices = @transform_2, window_bounds = array<i64: 1, 128>}, {transform_indices = @transform_3, window_bounds = array<i64: 1, 128>}, {transform_indices = @transform_4, window_bounds = array<i64: 1, 128>}]} {
    %c0_i32 = arith.constant 0 : i32
    %0 = arith.cmpi eq, %arg1, %c0_i32 : i32
    %1 = arith.extui %0 : i1 to i32
    %c0_i32_0 = arith.constant 0 : i32
    %2 = arith.cmpi ne, %1, %c0_i32_0 : i32
    scf.if %2 {
      %cst_13 = arith.constant 0.000000e+00 : f32
      %18 = vector.broadcast %cst_13 : f32 to vector<1x128xf32>
      %c0_14 = arith.constant 0 : index
      %c0_15 = arith.constant 0 : index
      %19 = vector.load %arg7[%c0_14, %c0_15] : memref<1x128xf32, #tpu.memory_space<vmem>>, vector<1x128xf32>
      tpu.vector_store %arg7[%c0_14, %c0_15], %18 {strides = array<i32>} : memref<1x128xf32, #tpu.memory_space<vmem>>, vector<1x128xf32>,
      %cst_16 = arith.constant 0.000000e+00 : f32
      %20 = vector.broadcast %cst_16 : f32 to vector<1x128xf32>
      %c0_17 = arith.constant 0 : index
      %c0_18 = arith.constant 0 : index
      %21 = vector.load %arg8[%c0_17, %c0_18] : memref<1x128xf32, #tpu.memory_space<vmem>>, vector<1x128xf32>
      tpu.vector_store %arg8[%c0_17, %c0_18], %20 {strides = array<i32>} : memref<1x128xf32, #tpu.memory_space<vmem>>, vector<1x128xf32>,
    } else {
    }
    %c0 = arith.constant 0 : index
    %c0_1 = arith.constant 0 : index
    %3 = vector.load %arg2[%c0, %c0_1] : memref<8x128xf32, #tpu.memory_space<vmem>>, vector<8x128xf32>
    %c0_2 = arith.constant 0 : index
    %c0_3 = arith.constant 0 : index
    %4 = vector.load %arg7[%c0_2, %c0_3] : memref<1x128xf32, #tpu.memory_space<vmem>>, vector<1x128xf32>
    %cst = arith.constant dense<0.000000e+00> : vector<128xf32>
    %5 = vector.multi_reduction <add>, %3, %cst [0] : vector<8x128xf32> to vector<128xf32>
    %6 = vector.shape_cast %5 : vector<128xf32> to vector<1x128xf32>
    %7 = arith.addf %4, %6 : vector<1x128xf32>
    %c0_4 = arith.constant 0 : index
    %c0_5 = arith.constant 0 : index
    %8 = vector.load %arg7[%c0_4, %c0_5] : memref<1x128xf32, #tpu.memory_space<vmem>>, vector<1x128xf32>
    tpu.vector_store %arg7[%c0_4, %c0_5], %7 {strides = array<i32>} : memref<1x128xf32, #tpu.memory_space<vmem>>, vector<1x128xf32>,
    %c0_6 = arith.constant 0 : index
    %c0_7 = arith.constant 0 : index
    %9 = vector.load %arg8[%c0_6, %c0_7] : memref<1x128xf32, #tpu.memory_space<vmem>>, vector<1x128xf32>
    %10 = arith.mulf %3, %3 : vector<8x128xf32>
    %cst_8 = arith.constant dense<0.000000e+00> : vector<128xf32>
    %11 = vector.multi_reduction <add>, %10, %cst_8 [0] : vector<8x128xf32> to vector<128xf32>
    %12 = vector.shape_cast %11 : vector<128xf32> to vector<1x128xf32>
    %13 = arith.addf %9, %12 : vector<1x128xf32>
    %c0_9 = arith.constant 0 : index
    %c0_10 = arith.constant 0 : index
    %14 = vector.load %arg8[%c0_9, %c0_10] : memref<1x128xf32, #tpu.memory_space<vmem>>, vector<1x128xf32>
    tpu.vector_store %arg8[%c0_9, %c0_10], %13 {strides = array<i32>} : memref<1x128xf32, #tpu.memory_space<vmem>>, vector<1x128xf32>,
    %c0_i32_11 = arith.constant 0 : i32
    %15 = arith.cmpi eq, %arg1, %c0_i32_11 : i32
    %16 = arith.extui %15 : i1 to i32
    %c0_i32_12 = arith.constant 0 : i32
    %17 = arith.cmpi ne, %16, %c0_i32_12 : i32
    scf.if %17 {
      %c0_13 = arith.constant 0 : index
      %c0_14 = arith.constant 0 : index
      %18 = vector.load %arg7[%c0_13, %c0_14] : memref<1x128xf32, #tpu.memory_space<vmem>>, vector<1x128xf32>
      %c0_15 = arith.constant 0 : index
      %c0_16 = arith.constant 0 : index
      %19 = vector.load %arg8[%c0_15, %c0_16] : memref<1x128xf32, #tpu.memory_space<vmem>>, vector<1x128xf32>
      %c32_i32 = arith.constant 32 : i32
      %20 = tpu.dynamic_rotate %18 by %c32_i32 dim 1 : vector<1x128xf32>, i32 -> vector<1x128xf32>
      %21 = arith.addf %18, %20 : vector<1x128xf32>
      %c32_i32_17 = arith.constant 32 : i32
      %22 = tpu.dynamic_rotate %19 by %c32_i32_17 dim 1 : vector<1x128xf32>, i32 -> vector<1x128xf32>
      %23 = arith.addf %19, %22 : vector<1x128xf32>
      %c64_i32 = arith.constant 64 : i32
      %24 = tpu.dynamic_rotate %21 by %c64_i32 dim 1 : vector<1x128xf32>, i32 -> vector<1x128xf32>
      %25 = arith.addf %21, %24 : vector<1x128xf32>
      %c64_i32_18 = arith.constant 64 : i32
      %26 = tpu.dynamic_rotate %23 by %c64_i32_18 dim 1 : vector<1x128xf32>, i32 -> vector<1x128xf32>
      %27 = arith.addf %23, %26 : vector<1x128xf32>
      %cst_19 = arith.constant 6.250000e-02 : f32
      %28 = vector.broadcast %cst_19 : f32 to vector<1x128xf32>
      %29 = arith.mulf %25, %28 : vector<1x128xf32>
      %cst_20 = arith.constant 6.250000e-02 : f32
      %30 = vector.broadcast %cst_20 : f32 to vector<1x128xf32>
      %31 = arith.mulf %27, %30 : vector<1x128xf32>
      %32 = arith.mulf %29, %29 : vector<1x128xf32>
      %33 = arith.subf %31, %32 : vector<1x128xf32>
      %cst_21 = arith.constant 0.000000e+00 : f32
      %34 = vector.broadcast %cst_21 : f32 to vector<1x128xf32>
      %35 = arith.maximumf %33, %34 : vector<1x128xf32>
      %cst_22 = arith.constant 9.99999974E-6 : f32
      %36 = vector.broadcast %cst_22 : f32 to vector<1x128xf32>
      %37 = arith.addf %35, %36 : vector<1x128xf32>
      %38 = math.rsqrt %37 : vector<1x128xf32>
      %c0_23 = arith.constant 0 : index
      %c0_24 = arith.constant 0 : index
      %39 = vector.load %arg3[%c0_23, %c0_24] : memref<1x128xf32, #tpu.memory_space<vmem>>, vector<1x128xf32>
      %c0_25 = arith.constant 0 : index
      %c0_26 = arith.constant 0 : index
      %40 = vector.load %arg4[%c0_25, %c0_26] : memref<1x128xf32, #tpu.memory_space<vmem>>, vector<1x128xf32>
      %41 = arith.mulf %39, %38 : vector<1x128xf32>
      %c0_27 = arith.constant 0 : index
      %c0_28 = arith.constant 0 : index
      %42 = vector.load %arg5[%c0_27, %c0_28] : memref<1x128xf32, #tpu.memory_space<vmem>>, vector<1x128xf32>
      tpu.vector_store %arg5[%c0_27, %c0_28], %41 {strides = array<i32>} : memref<1x128xf32, #tpu.memory_space<vmem>>, vector<1x128xf32>,
      %43 = arith.mulf %29, %41 : vector<1x128xf32>
      %44 = arith.subf %40, %43 : vector<1x128xf32>
      %c0_29 = arith.constant 0 : index
      %c0_30 = arith.constant 0 : index
      %45 = vector.load %arg6[%c0_29, %c0_30] : memref<1x128xf32, #tpu.memory_space<vmem>>, vector<1x128xf32>
      tpu.vector_store %arg6[%c0_29, %c0_30], %44 {strides = array<i32>} : memref<1x128xf32, #tpu.memory_space<vmem>>, vector<1x128xf32>,
    } else {
    }
    return
  }
  func.func @transform_0(%arg0: i32, %arg1: i32) -> (i32, i32) {
    %c0_i32 = arith.constant 0 : i32
    return %arg1, %arg0 : i32, i32
  }
  func.func @transform_1(%arg0: i32, %arg1: i32) -> (i32, i32) {
    %c0_i32 = arith.constant 0 : i32
    %c0_i32_0 = arith.constant 0 : i32
    return %c0_i32, %arg0 : i32, i32
  }
  func.func @transform_2(%arg0: i32, %arg1: i32) -> (i32, i32) {
    %c0_i32 = arith.constant 0 : i32
    %c0_i32_0 = arith.constant 0 : i32
    return %c0_i32, %arg0 : i32, i32
  }
  func.func @transform_3(%arg0: i32, %arg1: i32) -> (i32, i32) {
    %c0_i32 = arith.constant 0 : i32
    %c0_i32_0 = arith.constant 0 : i32
    return %c0_i32, %arg0 : i32, i32
  }
  func.func @transform_4(%arg0: i32, %arg1: i32) -> (i32, i32) {
    %c0_i32 = arith.constant 0 : i32
    %c0_i32_0 = arith.constant 0 : i32
    return %c0_i32, %arg0 : i32, i32
  }
}

</mosaic_0001>

<llo_original>
// kernel: tpu_custom_call.1
$region0: #{tpu_custom_call.1}
  #allocation0 [shape = 'u32[]', space=smem, size = 0x4, offset = 0x4, fixed_abs, tag = 'smem constant byte address 0x4 - core index']
  #allocation1 [shape = 'u32[72,128]{1,0:T(1,128)}', space=vmem, size = 0x9000, scoped, tag = 'internal scratch']
  #allocation2 [shape = 'f32[1,128]{1,0:T(1,128)}', space=vmem, size = 0x200, scoped, tag = 'scratch operand']
  #allocation3 [shape = 'f32[1,128]{1,0:T(1,128)}', space=vmem, size = 0x200, scoped, tag = 'scratch operand']
  %s0 = inlined_call_operand.hbm [shape: f32[8,128], index: 0, kind: input, shape index: {}]
  %s1 = inlined_call_operand.hbm [shape: f32[1,128], index: 1, kind: input, shape index: {}]
  %s2 = inlined_call_operand.vmem [shape: f32[1,128], index: 2, kind: input, shape index: {}]
  %s3 = inlined_call_operand.hbm [shape: f32[1,128], index: 3, kind: output, shape index: {0}]
  %s4 = inlined_call_operand.hbm [shape: f32[1,128], index: 4, kind: output, shape index: {1}]
  %5 = xla_tuple %s3, %s4
  %s6 = sld [smem:[#allocation0]]
  $region46: #{tpu_custom_call.1} parent=0
    _
  %s8 = ssub.s32 1, %s6
  %s9 = scalar_select 0, %s8, %s6
  $region1: #{tpu_custom_call.1} parent=0
    #allocation4 [shape = 'u8[4096]{0}', space=vmem, size = 0x1000, scoped, tag = 'input window, operand 0, single buffered']
    #allocation5 [shape = 's32[1]{0}', space=sflag, size = 0x4, scoped, tag = 'scoped memory for tpu_custom_call.1']
    #allocation6 [shape = 's32[1]{0}', space=sflag, size = 0x4, scoped, tag = 'scoped memory for tpu_custom_call.1']
    #allocation7 [shape = 'u8[512]{0}', space=vmem, size = 0x400, scoped, tag = 'input window, operand 1, single buffered']
    #allocation8 [shape = 's32[1]{0}', space=sflag, size = 0x4, scoped, tag = 'scoped memory for tpu_custom_call.1']
    #allocation9 [shape = 'u8[512]{0}', space=vmem, size = 0x400, scoped, tag = 'output window, operand 0, single buffered']
    #allocation10 [shape = 'u8[512]{0}', space=vmem, size = 0x400, scoped, tag = 'output window, operand 1, single buffered']
    #allocation11 [shape = 's32[1]{0}', space=sflag, size = 0x4, scoped, tag = 'scoped memory for tpu_custom_call.1']
    %10 = vsyncpa [#allocation5], 0
    %11 = vsyncpa [#allocation8], 0
    %12 = vsyncpa [#allocation6], 0
    %13 = vsyncpa [#allocation11], 0
    // Predicated region
    $region2: #{tpu_custom_call.1} parent=1 // pred_check
      _
    $region3: #{tpu_custom_call.1} parent=1 // pred_check_branch
      %15 = sbr.rel (0) target = $region5
    $region4: #{tpu_custom_call.1} parent=1 // pred_region
      %17 = vsyncadd [#allocation5], 0
      %s19 = sshll.u32 %s0, 4
      %s20 = int_to_ptr.hbm [resolvable:$true] %s19
      %s21 = sshll.u32 [#allocation4], 4
      %s22 = int_to_ptr.vmem [resolvable:$true] %s21
      %24 = dma.hbm_to_vmem [thread:$0]  %s20, 128, %s22, [#allocation5]
    $region5: #{tpu_custom_call.1} parent=1 // pred_fallthru
      _
    // Predicated region
    $region6: #{tpu_custom_call.1} parent=1 // pred_check
      _
    $region7: #{tpu_custom_call.1} parent=1 // pred_check_branch
      %26 = sbr.rel (0) target = $region9
    $region8: #{tpu_custom_call.1} parent=1 // pred_region
      %28 = vsyncadd [#allocation8], 0
      %s30 = sshll.u32 %s1, 4
      %s31 = int_to_ptr.hbm [resolvable:$true] %s30
      %s32 = sshll.u32 [#allocation7], 4
      %s33 = int_to_ptr.vmem [resolvable:$true] %s32
      %35 = dma.hbm_to_vmem [thread:$0]  %s31, 16, %s33, [#allocation8]
    $region9: #{tpu_custom_call.1} parent=1 // pred_fallthru
      _
    // Predicated region
    $region10: #{tpu_custom_call.1} parent=1 // pred_check
      _
    $region11: #{tpu_custom_call.1} parent=1 // pred_check_branch
      %37 = sbr.rel (0) target = $region13
    $region12: #{tpu_custom_call.1} parent=1 // pred_region
      _
    $region13: #{tpu_custom_call.1} parent=1 // pred_fallthru
      _
    // Predicated region
    $region14: #{tpu_custom_call.1} parent=1 // pred_check
      _
    $region15: #{tpu_custom_call.1} parent=1 // pred_check_branch
      %39 = sbr.rel (0) target = $region17
    $region16: #{tpu_custom_call.1} parent=1 // pred_region
      %41 = dma.done [#allocation5], 128
    $region17: #{tpu_custom_call.1} parent=1 // pred_fallthru
      _
    // Predicated region
    $region18: #{tpu_custom_call.1} parent=1 // pred_check
      _
    $region19: #{tpu_custom_call.1} parent=1 // pred_check_branch
      %43 = sbr.rel (0) target = $region21
    $region20: #{tpu_custom_call.1} parent=1 // pred_region
      %45 = dma.done [#allocation8], 16
    $region21: #{tpu_custom_call.1} parent=1 // pred_fallthru
      _
    %p46 = scmp.eq.s32.totalorder 0, 0
    // Predicated region
    $region22: #{tpu_custom_call.1} parent=1 // pred_check
      %p47 = pneg %p46
    $region23: #{tpu_custom_call.1} parent=1 // pred_check_branch
      %49 = sbr.rel (%p47) target = $region25
    $region24: #{tpu_custom_call.1} parent=1 // pred_region
      %50 = vst [vmem:[#allocation2] sm:$0x1] 0.0
      %51 = vst [vmem:[#allocation3] sm:$0x1] 0.0
    $region25: #{tpu_custom_call.1} parent=1 // pred_fallthru
      _
    %v52 = vld [vmem:[#allocation4] sm:$0xff]
    %v53 = vld [vmem:[#allocation2] sm:$0x1]
    %v54 = vrot.slane %v52, 4
    %v55 = vadd.f32 %v52, %v54
    %v56 = vrot.slane %v55, 2
    %v57 = vadd.f32 %v55, %v56
    %v58 = vrot.slane %v57, 1
    %v59 = vadd.f32 %v57, %v58
    %v60 = vadd.f32 %v53, %v59
    %61 = vst [vmem:[#allocation2] sm:$0x1] %v60
    %v62 = vld [vmem:[#allocation3] sm:$0x1]
    %v63 = vmul.f32 %v52, %v52
    %v64 = vrot.slane %v63, 4
    %v65 = vadd.f32 %v63, %v64
    %v66 = vrot.slane %v65, 2
    %v67 = vadd.f32 %v65, %v66
    %v68 = vrot.slane %v67, 1
    %v69 = vadd.f32 %v67, %v68
    %v70 = vadd.f32 %v62, %v69
    %71 = vst [vmem:[#allocation3] sm:$0x1] %v70
    // Predicated region
    $region26: #{tpu_custom_call.1} parent=1 // pred_check
      %p72 = pneg %p46
    $region27: #{tpu_custom_call.1} parent=1 // pred_check_branch
      %74 = sbr.rel (%p72) target = $region29
    $region28: #{tpu_custom_call.1} parent=1 // pred_region
      %v75 = vld [vmem:[#allocation2] sm:$0x1]
      %v76 = vld [vmem:[#allocation3] sm:$0x1]
      %77 = vrot.lane.b32.xlu0 %v75, 32
      %v78 = vpop.permute.xlu0 %77
      %v79 = vadd.f32 %v75, %v78
      %80 = vrot.lane.b32.xlu0 %v76, 32
      %v81 = vpop.permute.xlu0 %80
      %v82 = vadd.f32 %v76, %v81
      %83 = vrot.lane.b32.xlu0 %v79, 64
      %v84 = vpop.permute.xlu0 %83
      %v85 = vadd.f32 %v79, %v84
      %86 = vrot.lane.b32.xlu0 %v82, 64
      %v87 = vpop.permute.xlu0 %86
      %v88 = vadd.f32 %v82, %v87
      %v89 = vmul.f32 %v85, 0.0625
      %v90 = vmul.f32 %v88, 0.0625
      %v91 = vmul.f32 %v89, %v89
      %v92 = vsub.f32 %v90, %v91
      %v93 = vmax.f32 %v92, 0.0
      %v94 = vadd.f32 %v93, 1e-05
      %v95 = vrsqrt.pop %v94
      %v96 = vmul.f32 %v95, %v94
      %v97 = vmul.f32 %v96, %v95
      %v98 = vmul.f32 0.5, %v97
      %v99 = vsub.f32 1.5, %v98
      %v100 = vmul.f32 %v95, %v99
      %vm101 = vweird.f32 %v94
      %vm102 = vweird.f32 %v95
      %vm103 = vmor %vm101, %vm102
      %v104 = vsel %vm103, %v95, %v100
      %v105 = vld [vmem:[#allocation7] sm:$0x1]
      %v106 = vld [vmem:[%s2] sm:$0x1]
      %v107 = vmul.f32 %v105, %v104
      %108 = vst [vmem:[#allocation9] sm:$0x1] %v107
      %v109 = vmul.f32 %v89, %v107
      %v110 = vsub.f32 %v106, %v109
      %111 = vst [vmem:[#allocation10] sm:$0x1] %v110
    $region29: #{tpu_custom_call.1} parent=1 // pred_fallthru
      _
    // Predicated region
    $region30: #{tpu_custom_call.1} parent=1 // pred_check
      _
    $region31: #{tpu_custom_call.1} parent=1 // pred_check_branch
      %113 = sbr.rel (0) target = $region33
    $region32: #{tpu_custom_call.1} parent=1 // pred_region
      %115 = vsyncadd [#allocation6], 0
      %s117 = sshll.u32 [#allocation9], 4
      %s118 = int_to_ptr.vmem [resolvable:$true] %s117
      %s119 = sshll.u32 %s3, 4
      %s120 = int_to_ptr.hbm [resolvable:$true] %s119
      %122 = dma.vmem_to_hbm [thread:$0]  %s118, 16, %s120, [#allocation6]
    $region33: #{tpu_custom_call.1} parent=1 // pred_fallthru
      _
    // Predicated region
    $region34: #{tpu_custom_call.1} parent=1 // pred_check
      _
    $region35: #{tpu_custom_call.1} parent=1 // pred_check_branch
      %124 = sbr.rel (0) target = $region37
    $region36: #{tpu_custom_call.1} parent=1 // pred_region
      %126 = vsyncadd [#allocation11], 0
      %s128 = sshll.u32 [#allocation10], 4
      %s129 = int_to_ptr.vmem [resolvable:$true] %s128
      %s130 = sshll.u32 %s4, 4
      %s131 = int_to_ptr.hbm [resolvable:$true] %s130
      %133 = dma.vmem_to_hbm [thread:$0]  %s129, 16, %s131, [#allocation11]
    $region37: #{tpu_custom_call.1} parent=1 // pred_fallthru
      _
    // Predicated region
    $region38: #{tpu_custom_call.1} parent=1 // pred_check
      _
    $region39: #{tpu_custom_call.1} parent=1 // pred_check_branch
      %135 = sbr.rel (0) target = $region41
    $region40: #{tpu_custom_call.1} parent=1 // pred_region
      %137 = dma.done [#allocation6], 16
    $region41: #{tpu_custom_call.1} parent=1 // pred_fallthru
      _
    // Predicated region
    $region42: #{tpu_custom_call.1} parent=1 // pred_check
      _
    $region43: #{tpu_custom_call.1} parent=1 // pred_check_branch
      %139 = sbr.rel (0) target = $region45
    $region44: #{tpu_custom_call.1} parent=1 // pred_region
      %141 = dma.done [#allocation11], 16
    $region45: #{tpu_custom_call.1} parent=1 // pred_fallthru
      _
    %142 = vsyncpa [#allocation5], 1
    %143 = vsyncpa [#allocation8], 1
    %144 = vsyncpa [#allocation6], 1
    %145 = vsyncpa [#allocation11], 1

</llo_original>
